<compile_context>
chip_gen: v7x
topology: tpu7x:2x2x1
jax: 0.10.0
libtpu: 0.0.40
codegen_flags: <defaults>
</compile_context>

<pallas_src>
import jax
import jax.numpy as jnp
from jax.experimental import pallas as pl
from jax.experimental.pallas import tpu as pltpu

SPLITS = (19, 216, 128)
D_IN = sum(SPLITS)          # 363
D_H2 = 256
D_OUT = 7


def _round_up(x, m):
    return (x + m - 1) // m * m


D_IN_P = _round_up(D_IN, 128)    # 384  (lane-padded input / branch output)
D_H1_P = D_IN_P                  # 384  (block-diagonal stage-1 output)
D_H2_P = _round_up(D_H2, 128)    # 256
D_OUT_P = _round_up(D_OUT, 128)  # 128  (lane-dense output slab)


def mlp_kernel(x_ref, w1_ref, b1_ref, w2_ref, b2_ref, w3_ref, b3_ref, o_ref):
    """One batch tile through the whole fused network (3 chained MXU matmuls)."""
    h = x_ref[...]                                                        # bf16 [TM, 384]
    # Stage 1: block-diagonal fusion of fc1_1 / fc1_2 / fc1_3 (+ ReLU).
    h = jnp.dot(h, w1_ref[...], preferred_element_type=jnp.float32) + b1_ref[...]
    h = jnp.maximum(h, 0.0).astype(jnp.bfloat16)
    # Stage 2: fc2 (+ ReLU). Dropout(0.2) is identity in eval mode.
    h = jnp.dot(h, w2_ref[...], preferred_element_type=jnp.float32) + b2_ref[...]
    h = jnp.maximum(h, 0.0).astype(jnp.bfloat16)
    # Stage 3: fc3 (no activation).
    h = jnp.dot(h, w3_ref[...], preferred_element_type=jnp.float32) + b3_ref[...]
    o_ref[...] = h.astype(o_ref.dtype)


def prepare_params(weights, biases):
    """Pad once at init time (NOT per forward call) and cast matmul operands to bf16.

    Zero padding is exact: padded input features hit zero weight rows, padded
    bias entries are zero, ReLU(0)=0 keeps padding inert, final slice drops it.
    """
    w11, w12, w13, w2, w3 = weights
    b11, b12, b13, b2, b3 = biases

    # Block-diagonal stage-1 weight: exactly reproduces split->3 linears->concat.
    w1_blk = jnp.zeros((D_IN_P, D_H1_P), jnp.float32)
    off = 0
    for w in (w11, w12, w13):
        din, dout = w.shape
        w1_blk = w1_blk.at[off:off + din, off:off + dout].set(w)
        off += din
    b1_p = jnp.zeros((1, D_H1_P), jnp.float32).at[0, :D_IN].set(
        jnp.concatenate([b11, b12, b13]))

    w2_p = jnp.zeros((D_IN_P, D_H2_P), jnp.float32).at[:D_IN, :D_H2].set(w2)
    b2_p = jnp.zeros((1, D_H2_P), jnp.float32).at[0, :D_H2].set(b2)
    w3_p = jnp.zeros((D_H2_P, D_OUT_P), jnp.float32).at[:D_H2, :D_OUT].set(w3)
    b3_p = jnp.zeros((1, D_OUT_P), jnp.float32).at[0, :D_OUT].set(b3)

    return (w1_blk.astype(jnp.bfloat16), b1_p,
            w2_p.astype(jnp.bfloat16), b2_p,
            w3_p.astype(jnp.bfloat16), b3_p)


@jax.jit
def manual_forward(x, params):
    """x: [B, 363] f32 -> [B, 7] f32, using pre-padded bf16 params."""
    B = x.shape[0]
    w1, b1, w2, b2, w3, b3 = params

    # Batch tile: 256 fills the v6e/v7x MXU; small batches round to a multiple
    # of 16 (bf16 sublane packing). VMEM use is bounded independently of B.
    TM = 256 if B >= 256 else _round_up(max(B, 16), 16)
    TB = _round_up(B, TM)

    # Activation pad/cast stays inside jit so XLA fuses it with the input DMA.
    x_p = jnp.zeros((TB, D_IN_P), jnp.bfloat16).at[:B, :D_IN].set(
        x.astype(jnp.bfloat16))

    const = lambda i: (0, 0)   # weights/biases: same block every step -> VMEM-resident
    y_p = pl.pallas_call(
        mlp_kernel,
        out_shape=jax.ShapeDtypeStruct((TB, D_OUT_P), jnp.float32),
        grid_spec=pltpu.PrefetchScalarGridSpec(
            num_scalar_prefetch=0,
            grid=(TB // TM,),
            in_specs=[
                pl.BlockSpec((TM, D_IN_P), lambda i: (i, 0)),
                pl.BlockSpec((D_IN_P, D_H1_P), const),
                pl.BlockSpec((1, D_H1_P), const),
                pl.BlockSpec((D_H1_P, D_H2_P), const),
                pl.BlockSpec((1, D_H2_P), const),
                pl.BlockSpec((D_H2_P, D_OUT_P), const),
                pl.BlockSpec((1, D_OUT_P), const),
            ],
            out_specs=pl.BlockSpec((TM, D_OUT_P), lambda i: (i, 0)),
        ),
        compiler_params=pltpu.CompilerParams(
            # Independent batch tiles -> shardable across v7x's 2 TensorCores.
            dimension_semantics=("parallel",),
            # Well under v7x's 64 MiB physical VMEM; plenty on v5e/v6e too.
            vmem_limit_bytes=32 * 1024 * 1024,
        ),
    )(x_p, w1, b1, w2, b2, w3, b3)

    return y_p[:B, :D_OUT]


def init_params(key):
    """PyTorch-default-style init: U(-1/sqrt(fan_in), 1/sqrt(fan_in))."""
    dims = [(19, 19), (216, 216), (128, 128), (D_IN, D_H2), (D_H2, D_OUT)]
    weights, biases = [], []
    for din, dout in dims:
        key, kw, kb = jax.random.split(key, 3)
        bound = 1.0 / (din ** 0.5)
        weights.append(jax.random.uniform(kw, (din, dout), jnp.float32, -bound, bound))
        biases.append(jax.random.uniform(kb, (dout,), jnp.float32, -bound, bound))
    return tuple(weights), tuple(biases)


def reference_forward_f32(x, weights, biases):
    """Pure f32 reference matching the PyTorch forward (eval mode)."""
    w11, w12, w13, w2, w3 = weights
    b11, b12, b13, b2, b3 = biases
    x1, x2, x3 = jnp.split(x, [SPLITS[0], SPLITS[0] + SPLITS[1]], axis=1)
    h1 = jnp.maximum(x1 @ w11 + b11, 0.0)
    h2 = jnp.maximum(x2 @ w12 + b12, 0.0)
    h3 = jnp.maximum(x3 @ w13 + b13, 0.0)
    h = jnp.concatenate([h1, h2, h3], axis=1)
    h = jnp.maximum(h @ w2 + b2, 0.0)          # dropout: identity in eval
    return h @ w3 + b3


def reference_forward_bf16(x, params):
    """Mirrors the kernel math exactly (bf16 operands, f32 accumulation)."""
    w1, b1, w2, b2, w3, b3 = params
    B = x.shape[0]
    h = jnp.zeros((B, D_IN_P), jnp.bfloat16).at[:, :D_IN].set(x.astype(jnp.bfloat16))
    h = jnp.dot(h, w1, preferred_element_type=jnp.float32) + b1
    h = jnp.maximum(h, 0.0).astype(jnp.bfloat16)
    h = jnp.dot(h, w2, preferred_element_type=jnp.float32) + b2
    h = jnp.maximum(h, 0.0).astype(jnp.bfloat16)
    h = jnp.dot(h, w3, preferred_element_type=jnp.float32) + b3
    return h[:, :D_OUT]


if __name__ == "__main__":
    key = jax.random.PRNGKey(0)
    kx, kp = jax.random.split(key)

    weights, biases = init_params(kp)
    params = prepare_params(weights, biases)   # padded / cast ONCE, off the hot path

    # Tiny latency-bound case and a multi-tile case (grid=(2,), TM=256).
    for B in (4, 384):
        x = jax.random.normal(jax.random.fold_in(kx, B), (B, D_IN), jnp.float32)
        y = manual_forward(x, params)
        jax.block_until_ready(y)
        assert y.shape == (B, D_OUT), y.shape

        y_bf16 = reference_forward_bf16(x, params)     # same math as kernel
        y_f32 = reference_forward_f32(x, weights, biases)
        err_bf16 = float(jnp.max(jnp.abs(y - y_bf16)))
        err_f32 = float(jnp.max(jnp.abs(y - y_f32)))
        assert jnp.allclose(y, y_bf16, atol=1e-2, rtol=1e-2), err_bf16
        assert jnp.allclose(y, y_f32, atol=1e-1, rtol=1e-1), err_f32

    print("KERNEL_OK")
</pallas_src>

<mosaic_0001>
module attributes {stable_mosaic.version = 11 : i64} {
  func.func @mlp_kernel(%arg0: i32, %arg1: memref<16x384xbf16, #tpu.memory_space<vmem>>, %arg2: memref<384x384xbf16, #tpu.memory_space<vmem>>, %arg3: memref<1x384xf32, #tpu.memory_space<vmem>>, %arg4: memref<384x256xbf16, #tpu.memory_space<vmem>>, %arg5: memref<1x256xf32, #tpu.memory_space<vmem>>, %arg6: memref<256x128xbf16, #tpu.memory_space<vmem>>, %arg7: memref<1x128xf32, #tpu.memory_space<vmem>>, %arg8: memref<16x128xf32, #tpu.memory_space<vmem>>) attributes {dimension_semantics = [#tpu.dimension_semantics<parallel>], iteration_bounds = array<i64: 1>, scalar_prefetch = 0 : i64, scratch_operands = 0 : i64, tpu.core_type = #tpu.core_type<tc>, window_params = [{transform_indices = @transform_0, window_bounds = array<i64: 16, 384>}, {pipeline_mode = #tpu.pipeline_mode<synchronous>, transform_indices = @transform_1, window_bounds = array<i64: 384, 384>}, {pipeline_mode = #tpu.pipeline_mode<synchronous>, transform_indices = @transform_2, window_bounds = array<i64: 1, 384>}, {pipeline_mode = #tpu.pipeline_mode<synchronous>, transform_indices = @transform_3, window_bounds = array<i64: 384, 256>}, {pipeline_mode = #tpu.pipeline_mode<synchronous>, transform_indices = @transform_4, window_bounds = array<i64: 1, 256>}, {pipeline_mode = #tpu.pipeline_mode<synchronous>, transform_indices = @transform_5, window_bounds = array<i64: 256, 128>}, {pipeline_mode = #tpu.pipeline_mode<synchronous>, transform_indices = @transform_6, window_bounds = array<i64: 1, 128>}, {transform_indices = @transform_7, window_bounds = array<i64: 16, 128>}]} {
    %c0 = arith.constant 0 : index
    %c0_0 = arith.constant 0 : index
    %0 = vector.load %arg1[%c0, %c0_0] : memref<16x384xbf16, #tpu.memory_space<vmem>>, vector<16x384xbf16>
    %c0_1 = arith.constant 0 : index
    %c0_2 = arith.constant 0 : index
    %1 = vector.load %arg2[%c0_1, %c0_2] : memref<384x384xbf16, #tpu.memory_space<vmem>>, vector<384x384xbf16>
    %cst = arith.constant dense<0.000000e+00> : vector<16x384xf32>
    %2 = tpu.matmul %0, %1, %cst {dimension_numbers = #tpu.dot_dimension_numbers<[1], [0], [0], [1], [0, 0, 1, 1], [], []>} : vector<16x384xbf16>, vector<384x384xbf16>, vector<16x384xf32> -> vector<16x384xf32>
    %c0_3 = arith.constant 0 : index
    %c0_4 = arith.constant 0 : index
    %3 = vector.load %arg3[%c0_3, %c0_4] : memref<1x384xf32, #tpu.memory_space<vmem>>, vector<1x384xf32>
    %4 = vector.broadcast %3 : vector<1x384xf32> to vector<16x384xf32>
    %5 = arith.addf %2, %4 : vector<16x384xf32>
    %cst_5 = arith.constant 0.000000e+00 : f32
    %6 = vector.broadcast %cst_5 : f32 to vector<16x384xf32>
    %7 = arith.maximumf %5, %6 : vector<16x384xf32>
    %8 = arith.truncf %7 : vector<16x384xf32> to vector<16x384xbf16>
    %c0_6 = arith.constant 0 : index
    %c0_7 = arith.constant 0 : index
    %9 = vector.load %arg4[%c0_6, %c0_7] : memref<384x256xbf16, #tpu.memory_space<vmem>>, vector<384x256xbf16>
    %cst_8 = arith.constant dense<0.000000e+00> : vector<16x256xf32>
    %10 = tpu.matmul %8, %9, %cst_8 {dimension_numbers = #tpu.dot_dimension_numbers<[1], [0], [0], [1], [0, 0, 1, 1], [], []>} : vector<16x384xbf16>, vector<384x256xbf16>, vector<16x256xf32> -> vector<16x256xf32>
    %c0_9 = arith.constant 0 : index
    %c0_10 = arith.constant 0 : index
    %11 = vector.load %arg5[%c0_9, %c0_10] : memref<1x256xf32, #tpu.memory_space<vmem>>, vector<1x256xf32>
    %12 = vector.broadcast %11 : vector<1x256xf32> to vector<16x256xf32>
    %13 = arith.addf %10, %12 : vector<16x256xf32>
    %cst_11 = arith.constant 0.000000e+00 : f32
    %14 = vector.broadcast %cst_11 : f32 to vector<16x256xf32>
    %15 = arith.maximumf %13, %14 : vector<16x256xf32>
    %16 = arith.truncf %15 : vector<16x256xf32> to vector<16x256xbf16>
    %c0_12 = arith.constant 0 : index
    %c0_13 = arith.constant 0 : index
    %17 = vector.load %arg6[%c0_12, %c0_13] : memref<256x128xbf16, #tpu.memory_space<vmem>>, vector<256x128xbf16>
    %cst_14 = arith.constant dense<0.000000e+00> : vector<16x128xf32>
    %18 = tpu.matmul %16, %17, %cst_14 {dimension_numbers = #tpu.dot_dimension_numbers<[1], [0], [0], [1], [0, 0, 1, 1], [], []>} : vector<16x256xbf16>, vector<256x128xbf16>, vector<16x128xf32> -> vector<16x128xf32>
    %c0_15 = arith.constant 0 : index
    %c0_16 = arith.constant 0 : index
    %19 = vector.load %arg7[%c0_15, %c0_16] : memref<1x128xf32, #tpu.memory_space<vmem>>, vector<1x128xf32>
    %20 = vector.broadcast %19 : vector<1x128xf32> to vector<16x128xf32>
    %21 = arith.addf %18, %20 : vector<16x128xf32>
    %c0_17 = arith.constant 0 : index
    %c0_18 = arith.constant 0 : index
    %22 = vector.load %arg8[%c0_17, %c0_18] : memref<16x128xf32, #tpu.memory_space<vmem>>, vector<16x128xf32>
    tpu.vector_store %arg8[%c0_17, %c0_18], %21 {strides = array<i32>} : memref<16x128xf32, #tpu.memory_space<vmem>>, vector<16x128xf32>,
    return
  }
  func.func @transform_0(%arg0: i32) -> (i32, i32) {
    %c0_i32 = arith.constant 0 : i32
    %c0_i32_0 = arith.constant 0 : i32
    return %arg0, %c0_i32 : i32, i32
  }
  func.func @transform_1(%arg0: i32) -> (i32, i32) {
    %c0_i32 = arith.constant 0 : i32
    %c0_i32_0 = arith.constant 0 : i32
    %c0_i32_1 = arith.constant 0 : i32
    return %c0_i32, %c0_i32_0 : i32, i32
  }
  func.func @transform_2(%arg0: i32) -> (i32, i32) {
    %c0_i32 = arith.constant 0 : i32
    %c0_i32_0 = arith.constant 0 : i32
    %c0_i32_1 = arith.constant 0 : i32
    return %c0_i32, %c0_i32_0 : i32, i32
  }
  func.func @transform_3(%arg0: i32) -> (i32, i32) {
    %c0_i32 = arith.constant 0 : i32
    %c0_i32_0 = arith.constant 0 : i32
    %c0_i32_1 = arith.constant 0 : i32
    return %c0_i32, %c0_i32_0 : i32, i32
  }
  func.func @transform_4(%arg0: i32) -> (i32, i32) {
    %c0_i32 = arith.constant 0 : i32
    %c0_i32_0 = arith.constant 0 : i32
    %c0_i32_1 = arith.constant 0 : i32
    return %c0_i32, %c0_i32_0 : i32, i32
  }
  func.func @transform_5(%arg0: i32) -> (i32, i32) {
    %c0_i32 = arith.constant 0 : i32
    %c0_i32_0 = arith.constant 0 : i32
    %c0_i32_1 = arith.constant 0 : i32
    return %c0_i32, %c0_i32_0 : i32, i32
  }
  func.func @transform_6(%arg0: i32) -> (i32, i32) {
    %c0_i32 = arith.constant 0 : i32
    %c0_i32_0 = arith.constant 0 : i32
    %c0_i32_1 = arith.constant 0 : i32
    return %c0_i32, %c0_i32_0 : i32, i32
  }
  func.func @transform_7(%arg0: i32) -> (i32, i32) {
    %c0_i32 = arith.constant 0 : i32
    %c0_i32_0 = arith.constant 0 : i32
    return %arg0, %c0_i32 : i32, i32
  }
}

</mosaic_0001>

<llo_original>
// kernel: manual_forward.1
$region0: #{manual_forward.1}
  #allocation0 [shape = 'u32[]', space=smem, size = 0x4, offset = 0x4, fixed_abs, tag = 'smem constant byte address 0x4 - core index']
  #allocation1 [shape = 'u32[144,128]{1,0:T(1,128)}', space=vmem, size = 0x12000, scoped, tag = 'internal scratch']
  %s0 = inlined_call_operand.vmem [shape: bf16[16,384], index: 0, kind: input, shape index: {}]
  %s1 = inlined_call_operand.hbm [shape: bf16[384,384], index: 1, kind: input, shape index: {}]
  %s2 = inlined_call_operand.vmem [shape: f32[1,384], index: 2, kind: input, shape index: {}]
  %s3 = inlined_call_operand.hbm [shape: bf16[384,256], index: 3, kind: input, shape index: {}]
  %s4 = inlined_call_operand.vmem [shape: f32[1,256], index: 4, kind: input, shape index: {}]
  %s5 = inlined_call_operand.hbm [shape: bf16[256,128], index: 5, kind: input, shape index: {}]
  %s6 = inlined_call_operand.vmem [shape: f32[1,128], index: 6, kind: input, shape index: {}]
  %s7 = inlined_call_operand.vmem [shape: f32[16,128], index: 7, kind: output, shape index: {}]
  %s8 = sld [smem:[#allocation0]]
  $region50: #{manual_forward.1} parent=0
    _
  %s10 = ssub.s32 1, %s8
  %s11 = scalar_select 0, %s10, %s8
  $region1: #{manual_forward.1} parent=0
    #allocation2 [shape = 'u8[294912]{0}', space=vmem, size = 0x48000, scoped, tag = 'input window, operand 1, single buffered']
    #allocation3 [shape = 's32[1]{0}', space=sflag, size = 0x4, scoped, tag = 'scoped memory for manual_forward.1']
    #allocation4 [shape = 'u8[196608]{0}', space=vmem, size = 0x30000, scoped, tag = 'input window, operand 3, single buffered']
    #allocation5 [shape = 's32[1]{0}', space=sflag, size = 0x4, scoped, tag = 'scoped memory for manual_forward.1']
    #allocation6 [shape = 'u8[65536]{0}', space=vmem, size = 0x10000, scoped, tag = 'input window, operand 5, single buffered']
    %12 = vsyncpa [#allocation3], 0
    %13 = vsyncpa [#allocation5], 0
    // Predicated region
    $region2: #{manual_forward.1} parent=1 // pred_check
      _
    $region3: #{manual_forward.1} parent=1 // pred_check_branch
      %15 = sbr.rel (0) target = $region5
    $region4: #{manual_forward.1} parent=1 // pred_region
      _
    $region5: #{manual_forward.1} parent=1 // pred_fallthru
      _
    // Predicated region
    $region6: #{manual_forward.1} parent=1 // pred_check
      _
    $region7: #{manual_forward.1} parent=1 // pred_check_branch
      %17 = sbr.rel (0) target = $region9
    $region8: #{manual_forward.1} parent=1 // pred_region
      %s19 = ssub.s32 9216, 9216
      %20 = vsyncadd [#allocation3], %s19
      %s21 = sshll.u32 [#allocation2], 4
      %s22 = int_to_ptr.vmem [resolvable:$true] %s21
      %27 = dma.hbm_to_vmem [thread:$0]  %s1, 9216, %s22, [#allocation3], 192, 192, 12
    $region9: #{manual_forward.1} parent=1 // pred_fallthru
      _
    // Predicated region
    $region10: #{manual_forward.1} parent=1 // pred_check
      _
    $region11: #{manual_forward.1} parent=1 // pred_check_branch
      %29 = sbr.rel (0) target = $region13
    $region12: #{manual_forward.1} parent=1 // pred_region
      _
    $region13: #{manual_forward.1} parent=1 // pred_fallthru
      _
    // Predicated region
    $region14: #{manual_forward.1} parent=1 // pred_check
      _
    $region15: #{manual_forward.1} parent=1 // pred_check_branch
      %31 = sbr.rel (0) target = $region17
    $region16: #{manual_forward.1} parent=1 // pred_region
      %s33 = ssub.s32 6144, 6144
      %34 = vsyncadd [#allocation5], %s33
      %s35 = sshll.u32 [#allocation4], 4
      %s36 = int_to_ptr.vmem [resolvable:$true] %s35
      %41 = dma.hbm_to_vmem [thread:$0]  %s3, 6144, %s36, [#allocation5], 128, 128, 8
    $region17: #{manual_forward.1} parent=1 // pred_fallthru
      _
    // Predicated region
    $region18: #{manual_forward.1} parent=1 // pred_check
      _
    $region19: #{manual_forward.1} parent=1 // pred_check_branch
      %43 = sbr.rel (0) target = $region21
    $region20: #{manual_forward.1} parent=1 // pred_region
      _
    $region21: #{manual_forward.1} parent=1 // pred_fallthru
      _
    // Predicated region
    $region22: #{manual_forward.1} parent=1 // pred_check
      _
    $region23: #{manual_forward.1} parent=1 // pred_check_branch
      %45 = sbr.rel (0) target = $region25
    $region24: #{manual_forward.1} parent=1 // pred_region
      %s47 = ssub.s32 2048, 2048
      %48 = vsyncadd [#allocation5], %s47
      %s49 = sshll.u32 [#allocation6], 4
      %s50 = int_to_ptr.vmem [resolvable:$true] %s49
      %55 = dma.hbm_to_vmem [thread:$0]  %s5, 2048, %s50, [#allocation5], 64, 64, 4
    $region25: #{manual_forward.1} parent=1 // pred_fallthru
      _
    // Predicated region
    $region26: #{manual_forward.1} parent=1 // pred_check
      _
    $region27: #{manual_forward.1} parent=1 // pred_check_branch
      %57 = sbr.rel (0) target = $region29
    $region28: #{manual_forward.1} parent=1 // pred_region
      _
    $region29: #{manual_forward.1} parent=1 // pred_fallthru
      _
    // Predicated region
    $region30: #{manual_forward.1} parent=1 // pred_check
      _
    $region31: #{manual_forward.1} parent=1 // pred_check_branch
      %59 = sbr.rel (0) target = $region33
    $region32: #{manual_forward.1} parent=1 // pred_region
      %60 = dma.done [#allocation3], 9216
    $region33: #{manual_forward.1} parent=1 // pred_fallthru
      _
    // Predicated region
    $region34: #{manual_forward.1} parent=1 // pred_check
      _
    $region35: #{manual_forward.1} parent=1 // pred_check_branch
      %62 = sbr.rel (0) target = $region37
    $region36: #{manual_forward.1} parent=1 // pred_region
      %63 = dma.done [#allocation5], 6144
    $region37: #{manual_forward.1} parent=1 // pred_fallthru
      _
    // Predicated region
    $region38: #{manual_forward.1} parent=1 // pred_check
      _
    $region39: #{manual_forward.1} parent=1 // pred_check_branch
      %65 = sbr.rel (0) target = $region41
    $region40: #{manual_forward.1} parent=1 // pred_region
      %66 = dma.done [#allocation5], 2048
    $region41: #{manual_forward.1} parent=1 // pred_fallthru
      _
    %v68 = vld [vmem:[%s0] sm:$0xff]
    %v69 = vld [vmem:[%s0 + $0x8] sm:$0xf]
    %v70 = vld [vmem:[%s0 + $0xc] sm:$0xff]
    %v71 = vld [vmem:[%s0 + $0x14] sm:$0xf]
    %v72 = vld [vmem:[#allocation2] sm:$0xff]
    %v73 = vld [vmem:[#allocation2 + $0x8] sm:$0xf]
    %v74 = vld [vmem:[#allocation2 + $0xc] sm:$0xff]
    %v75 = vld [vmem:[#allocation2 + $0x14] sm:$0xf]
    %v76 = vld [vmem:[#allocation2 + $0x18] sm:$0xff]
    %v77 = vld [vmem:[#allocation2 + $0x20] sm:$0xf]
    %v78 = vld [vmem:[#allocation2 + $0x24] sm:$0xff]
    %v79 = vld [vmem:[#allocation2 + $0x2c] sm:$0xf]
    %v80 = vld [vmem:[#allocation2 + $0x30] sm:$0xff]
    %v81 = vld [vmem:[#allocation2 + $0x38] sm:$0xf]
    %v82 = vld [vmem:[#allocation2 + $0x3c] sm:$0xff]
    %v83 = vld [vmem:[#allocation2 + $0x44] sm:$0xf]
    %v84 = vld [vmem:[#allocation2 + $0x48] sm:$0xff]
    %v85 = vld [vmem:[#allocation2 + $0x50] sm:$0xf]
    %v86 = vld [vmem:[#allocation2 + $0x54] sm:$0xff]
    %v87 = vld [vmem:[#allocation2 + $0x5c] sm:$0xf]
    %v88 = vld [vmem:[#allocation2 + $0x60] sm:$0xff]
    %v89 = vld [vmem:[#allocation2 + $0x68] sm:$0xf]
    %v90 = vld [vmem:[#allocation2 + $0x6c] sm:$0xff]
    %v91 = vld [vmem:[#allocation2 + $0x74] sm:$0xf]
    %v92 = vld [vmem:[#allocation2 + $0x78] sm:$0xff]
    %v93 = vld [vmem:[#allocation2 + $0x80] sm:$0xf]
    %v94 = vld [vmem:[#allocation2 + $0x84] sm:$0xff]
    %v95 = vld [vmem:[#allocation2 + $0x8c] sm:$0xf]
    %v96 = vld [vmem:[#allocation2 + $0x90] sm:$0xff]
    %v97 = vld [vmem:[#allocation2 + $0x98] sm:$0xf]
    %v98 = vld [vmem:[#allocation2 + $0x9c] sm:$0xff]
    %v99 = vld [vmem:[#allocation2 + $0xa4] sm:$0xf]
    %v100 = vld [vmem:[#allocation2 + $0xa8] sm:$0xff]
    %v101 = vld [vmem:[#allocation2 + $0xb0] sm:$0xf]
    %v102 = vld [vmem:[#allocation2 + $0xb4] sm:$0xff]
    %v103 = vld [vmem:[#allocation2 + $0xbc] sm:$0xf]
    %v104 = vld [vmem:[#allocation2 + $0xc0] sm:$0xff]
    %v105 = vld [vmem:[#allocation2 + $0xc8] sm:$0xf]
    %v106 = vld [vmem:[#allocation2 + $0xcc] sm:$0xff]
    %v107 = vld [vmem:[#allocation2 + $0xd4] sm:$0xf]
    %v108 = vld [vmem:[#allocation2 + $0xd8] sm:$0xff]
    %v109 = vld [vmem:[#allocation2 + $0xe0] sm:$0xf]
    %v110 = vld [vmem:[#allocation2 + $0xe4] sm:$0xff]
    %v111 = vld [vmem:[#allocation2 + $0xec] sm:$0xf]
    %v112 = vld [vmem:[#allocation2 + $0xf0] sm:$0xff]
    %v113 = vld [vmem:[#allocation2 + $0xf8] sm:$0xf]
    %v114 = vld [vmem:[#allocation2 + $0xfc] sm:$0xff]
    %v115 = vld [vmem:[#allocation2 + $0x104] sm:$0xf]
    %v116 = vld [vmem:[#allocation2 + $0x108] sm:$0xff]
    %v117 = vld [vmem:[#allocation2 + $0x110] sm:$0xf]
    %v118 = vld [vmem:[#allocation2 + $0x114] sm:$0xff]
    %v119 = vld [vmem:[#allocation2 + $0x11c] sm:$0xf]
    %v120 = vld [vmem:[#allocation2 + $0x120] sm:$0xff]
    %v121 = vld [vmem:[#allocation2 + $0x128] sm:$0xf]
    %v122 = vld [vmem:[#allocation2 + $0x12c] sm:$0xff]
    %v123 = vld [vmem:[#allocation2 + $0x134] sm:$0xf]
    %v124 = vld [vmem:[#allocation2 + $0x138] sm:$0xff]
    %v125 = vld [vmem:[#allocation2 + $0x140] sm:$0xf]
    %v126 = vld [vmem:[#allocation2 + $0x144] sm:$0xff]
    %v127 = vld [vmem:[#allocation2 + $0x14c] sm:$0xf]
    %v128 = vld [vmem:[#allocation2 + $0x150] sm:$0xff]
    %v129 = vld [vmem:[#allocation2 + $0x158] sm:$0xf]
    %v130 = vld [vmem:[#allocation2 + $0x15c] sm:$0xff]
    %v131 = vld [vmem:[#allocation2 + $0x164] sm:$0xf]
    %v132 = vld [vmem:[#allocation2 + $0x168] sm:$0xff]
    %v133 = vld [vmem:[#allocation2 + $0x170] sm:$0xf]
    %v134 = vld [vmem:[#allocation2 + $0x174] sm:$0xff]
    %v135 = vld [vmem:[#allocation2 + $0x17c] sm:$0xf]
    %v136 = vld [vmem:[#allocation2 + $0x180] sm:$0xff]
    %v137 = vld [vmem:[#allocation2 + $0x188] sm:$0xf]
    %v138 = vld [vmem:[#allocation2 + $0x18c] sm:$0xff]
    %v139 = vld [vmem:[#allocation2 + $0x194] sm:$0xf]
    %v140 = vld [vmem:[#allocation2 + $0x198] sm:$0xff]
    %v141 = vld [vmem:[#allocation2 + $0x1a0] sm:$0xf]
    %v142 = vld [vmem:[#allocation2 + $0x1a4] sm:$0xff]
    %v143 = vld [vmem:[#allocation2 + $0x1ac] sm:$0xf]
    %v144 = vld [vmem:[#allocation2 + $0x1b0] sm:$0xff]
    %v145 = vld [vmem:[#allocation2 + $0x1b8] sm:$0xf]
    %v146 = vld [vmem:[#allocation2 + $0x1bc] sm:$0xff]
    %v147 = vld [vmem:[#allocation2 + $0x1c4] sm:$0xf]
    %v148 = vld [vmem:[#allocation2 + $0x1c8] sm:$0xff]
    %v149 = vld [vmem:[#allocation2 + $0x1d0] sm:$0xf]
    %v150 = vld [vmem:[#allocation2 + $0x1d4] sm:$0xff]
    %v151 = vld [vmem:[#allocation2 + $0x1dc] sm:$0xf]
    %v152 = vld [vmem:[#allocation2 + $0x1e0] sm:$0xff]
    %v153 = vld [vmem:[#allocation2 + $0x1e8] sm:$0xf]
    %v154 = vld [vmem:[#allocation2 + $0x1ec] sm:$0xff]
    %v155 = vld [vmem:[#allocation2 + $0x1f4] sm:$0xf]
    %v156 = vld [vmem:[#allocation2 + $0x1f8] sm:$0xff]
    %v157 = vld [vmem:[#allocation2 + $0x200] sm:$0xf]
    %v158 = vld [vmem:[#allocation2 + $0x204] sm:$0xff]
    %v159 = vld [vmem:[#allocation2 + $0x20c] sm:$0xf]
    %v160 = vld [vmem:[#allocation2 + $0x210] sm:$0xff]
    %v161 = vld [vmem:[#allocation2 + $0x218] sm:$0xf]
    %v162 = vld [vmem:[#allocation2 + $0x21c] sm:$0xff]
    %v163 = vld [vmem:[#allocation2 + $0x224] sm:$0xf]
    %v164 = vld [vmem:[#allocation2 + $0x228] sm:$0xff]
    %v165 = vld [vmem:[#allocation2 + $0x230] sm:$0xf]
    %v166 = vld [vmem:[#allocation2 + $0x234] sm:$0xff]
    %v167 = vld [vmem:[#allocation2 + $0x23c] sm:$0xf]
    %v168 = vld [vmem:[%s2] sm:$0x7]
    %v170 = vlaneseq
    %v171 = vshrl.u32 %v170, 7
    %v172 = vsub.s32 0, %v171
    %v173 = vrot.slane %v168, %v172
    %v174 = vlaneseq
    %v175 = vshrl.u32 %v174, 7
    %v176 = vsub.s32 1, %v175
    %v177 = vrot.slane %v168, %v176
    %v178 = vlaneseq
    %v179 = vshrl.u32 %v178, 7
    %v180 = vsub.s32 2, %v179
    %v181 = vrot.slane %v168, %v180
    %v189 = vunpack.c.l.b16 %v68
    %v190 = vunpack.c.h.b16 %v68
    %v191 = vunpack.c.l.b16 %v69
    %v192 = vunpack.c.l.b16 %v70
    %v193 = vunpack.c.h.b16 %v70
    %v194 = vunpack.c.l.b16 %v71
    %v195 = vpack.c.b16 %v192, %v189
    %v196 = vpack.c.b16 %v193, %v190
    %v197 = vpack.c.b16 %v194, %v191
    %v297 = vunpack.c.l.b16 %v72
    %v298 = vunpack.c.h.b16 %v72
    %v299 = vunpack.c.l.b16 %v73
    %v300 = vunpack.c.l.b16 %v74
    %v301 = vunpack.c.h.b16 %v74
    %v302 = vunpack.c.l.b16 %v75
    %v303 = vunpack.c.l.b16 %v76
    %v304 = vunpack.c.h.b16 %v76
    %v305 = vunpack.c.l.b16 %v77
    %v306 = vunpack.c.l.b16 %v78
    %v307 = vunpack.c.h.b16 %v78
    %v308 = vunpack.c.l.b16 %v79
    %v309 = vunpack.c.l.b16 %v80
    %v310 = vunpack.c.h.b16 %v80
    %v311 = vunpack.c.l.b16 %v81
    %v312 = vunpack.c.l.b16 %v82
    %v313 = vunpack.c.h.b16 %v82
    %v314 = vunpack.c.l.b16 %v83
    %v315 = vunpack.c.l.b16 %v84
    %v316 = vunpack.c.h.b16 %v84
    %v317 = vunpack.c.l.b16 %v85
    %v318 = vunpack.c.l.b16 %v86
    %v319 = vunpack.c.h.b16 %v86
    %v320 = vunpack.c.l.b16 %v87
    %v321 = vunpack.c.l.b16 %v88
    %v322 = vunpack.c.h.b16 %v88
    %v323 = vunpack.c.l.b16 %v89
    %v324 = vunpack.c.l.b16 %v90
    %v325 = vunpack.c.h.b16 %v90
    %v326 = vunpack.c.l.b16 %v91
    %v327 = vunpack.c.l.b16 %v92
    %v328 = vunpack.c.h.b16 %v92
    %v329 = vunpack.c.l.b16 %v93
    %v330 = vunpack.c.l.b16 %v94
    %v331 = vunpack.c.h.b16 %v94
    %v332 = vunpack.c.l.b16 %v95
    %v333 = vunpack.c.l.b16 %v96
    %v334 = vunpack.c.h.b16 %v96
    %v335 = vunpack.c.l.b16 %v97
    %v336 = vunpack.c.l.b16 %v98
    %v337 = vunpack.c.h.b16 %v98
    %v338 = vunpack.c.l.b16 %v99
    %v339 = vunpack.c.l.b16 %v100
    %v340 = vunpack.c.h.b16 %v100
    %v341 = vunpack.c.l.b16 %v101
    %v342 = vunpack.c.l.b16 %v102
    %v343 = vunpack.c.h.b16 %v102
    %v344 = vunpack.c.l.b16 %v103
    %v345 = vunpack.c.l.b16 %v104
    %v346 = vunpack.c.h.b16 %v104
    %v347 = vunpack.c.l.b16 %v105
    %v348 = vunpack.c.l.b16 %v106
    %v349 = vunpack.c.h.b16 %v106
    %v350 = vunpack.c.l.b16 %v107
    %v351 = vunpack.c.l.b16 %v108
    %v352 = vunpack.c.h.b16 %v108
    %v353 = vunpack.c.l.b16 %v109
    %v354 = vunpack.c.l.b16 %v110
    %v355 = vunpack.c.h.b16 %v110
    %v356 = vunpack.c.l.b16 %v111
    %v357 = vunpack.c.l.b16 %v112
    %v358 = vunpack.c.h.b16 %v112
    %v359 = vunpack.c.l.b16 %v113
    %v360 = vunpack.c.l.b16 %v114
    %v361 = vunpack.c.h.b16 %v114
    %v362 = vunpack.c.l.b16 %v115
    %v363 = vunpack.c.l.b16 %v116
    %v364 = vunpack.c.h.b16 %v116
    %v365 = vunpack.c.l.b16 %v117
    %v366 = vunpack.c.l.b16 %v118
    %v367 = vunpack.c.h.b16 %v118
    %v368 = vunpack.c.l.b16 %v119
    %v369 = vunpack.c.l.b16 %v120
    %v370 = vunpack.c.h.b16 %v120
    %v371 = vunpack.c.l.b16 %v121
    %v372 = vunpack.c.l.b16 %v122
    %v373 = vunpack.c.h.b16 %v122
    %v374 = vunpack.c.l.b16 %v123
    %v375 = vunpack.c.l.b16 %v124
    %v376 = vunpack.c.h.b16 %v124
    %v377 = vunpack.c.l.b16 %v125
    %v378 = vunpack.c.l.b16 %v126
    %v379 = vunpack.c.h.b16 %v126
    %v380 = vunpack.c.l.b16 %v127
    %v381 = vunpack.c.l.b16 %v128
    %v382 = vunpack.c.h.b16 %v128
    %v383 = vunpack.c.l.b16 %v129
    %v384 = vunpack.c.l.b16 %v130
    %v385 = vunpack.c.h.b16 %v130
    %v386 = vunpack.c.l.b16 %v131
    %v387 = vunpack.c.l.b16 %v132
    %v388 = vunpack.c.h.b16 %v132
    %v389 = vunpack.c.l.b16 %v133
    %v390 = vunpack.c.l.b16 %v134
    %v391 = vunpack.c.h.b16 %v134
    %v392 = vunpack.c.l.b16 %v135
    %v393 = vunpack.c.l.b16 %v136
    %v394 = vunpack.c.h.b16 %v136
    %v395 = vunpack.c.l.b16 %v137
    %v396 = vunpack.c.l.b16 %v138
    %v397 = vunpack.c.h.b16 %v138
    %v398 = vunpack.c.l.b16 %v139
    %v399 = vunpack.c.l.b16 %v140
    %v400 = vunpack.c.h.b16 %v140
    %v401 = vunpack.c.l.b16 %v141
    %v402 = vunpack.c.l.b16 %v142
    %v403 = vunpack.c.h.b16 %v142
    %v404 = vunpack.c.l.b16 %v143
    %v405 = vunpack.c.l.b16 %v144
    %v406 = vunpack.c.h.b16 %v144
    %v407 = vunpack.c.l.b16 %v145
    %v408 = vunpack.c.l.b16 %v146
    %v409 = vunpack.c.h.b16 %v146
    %v410 = vunpack.c.l.b16 %v147
    %v411 = vunpack.c.l.b16 %v148
    %v412 = vunpack.c.h.b16 %v148
    %v413 = vunpack.c.l.b16 %v149
    %v414 = vunpack.c.l.b16 %v150
    %v415 = vunpack.c.h.b16 %v150
    %v416 = vunpack.c.l.b16 %v151
    %v417 = vunpack.c.l.b16 %v152
    %v418 = vunpack.c.h.b16 %v152
    %v419 = vunpack.c.l.b16 %v153
    %v420 = vunpack.c.l.b16 %v154
    %v421 = vunpack.c.h.b16 %v154
    %v422 = vunpack.c.l.b16 %v155
    %v423 = vunpack.c.l.b16 %v156
    %v424 = vunpack.c.h.b16 %v156
    %v425 = vunpack.c.l.b16 %v157
    %v426 = vunpack.c.l.b16 %v158
    %v427 = vunpack.c.h.b16 %v158
    %v428 = vunpack.c.l.b16 %v159
    %v429 = vunpack.c.l.b16 %v160
    %v430 = vunpack.c.h.b16 %v160
    %v431 = vunpack.c.l.b16 %v161
    %v432 = vunpack.c.l.b16 %v162
    %v433 = vunpack.c.h.b16 %v162
    %v434 = vunpack.c.l.b16 %v163
    %v435 = vunpack.c.l.b16 %v164
    %v436 = vunpack.c.h.b16 %v164
    %v437 = vunpack.c.l.b16 %v165
    %v438 = vunpack.c.l.b16 %v166
    %v439 = vunpack.c.h.b16 %v166
    %v440 = vunpack.c.l.b16 %v167
    %v441 = vpack.c.b16 %v300, %v297
    %v442 = vpack.c.b16 %v301, %v298
    %v443 = vpack.c.b16 %v302, %v299
    %v444 = vpack.c.b16 %v306, %v303
    %v445 = vpack.c.b16 %v307, %v304
    %v446 = vpack.c.b16 %v308, %v305
    %v447 = vpack.c.b16 %v312, %v309
    %v448 = vpack.c.b16 %v313, %v310
    %v449 = vpack.c.b16 %v314, %v311
    %v450 = vpack.c.b16 %v318, %v315
    %v451 = vpack.c.b16 %v319, %v316
    %v452 = vpack.c.b16 %v320, %v317
    %v453 = vpack.c.b16 %v324, %v321
    %v454 = vpack.c.b16 %v325, %v322
    %v455 = vpack.c.b16 %v326, %v323
    %v456 = vpack.c.b16 %v330, %v327
    %v457 = vpack.c.b16 %v331, %v328
    %v458 = vpack.c.b16 %v332, %v329
    %v459 = vpack.c.b16 %v336, %v333
    %v460 = vpack.c.b16 %v337, %v334
    %v461 = vpack.c.b16 %v338, %v335
    %v462 = vpack.c.b16 %v342, %v339
    %v463 = vpack.c.b16 %v343, %v340
    %v464 = vpack.c.b16 %v344, %v341
    %v465 = vpack.c.b16 %v348, %v345
    %v466 = vpack.c.b16 %v349, %v346
    %v467 = vpack.c.b16 %v350, %v347
    %v468 = vpack.c.b16 %v354, %v351
    %v469 = vpack.c.b16 %v355, %v352
    %v470 = vpack.c.b16 %v356, %v353
    %v471 = vpack.c.b16 %v360, %v357
    %v472 = vpack.c.b16 %v361, %v358
    %v473 = vpack.c.b16 %v362, %v359
    %v474 = vpack.c.b16 %v366, %v363
    %v475 = vpack.c.b16 %v367, %v364
    %v476 = vpack.c.b16 %v368, %v365
    %v477 = vpack.c.b16 %v372, %v369
    %v478 = vpack.c.b16 %v373, %v370
    %v479 = vpack.c.b16 %v374, %v371
    %v480 = vpack.c.b16 %v378, %v375
    %v481 = vpack.c.b16 %v379, %v376
    %v482 = vpack.c.b16 %v380, %v377
    %v483 = vpack.c.b16 %v384, %v381
    %v484 = vpack.c.b16 %v385, %v382
    %v485 = vpack.c.b16 %v386, %v383
    %v486 = vpack.c.b16 %v390, %v387
    %v487 = vpack.c.b16 %v391, %v388
    %v488 = vpack.c.b16 %v392, %v389
    %v489 = vpack.c.b16 %v396, %v393
    %v490 = vpack.c.b16 %v397, %v394
    %v491 = vpack.c.b16 %v398, %v395
    %v492 = vpack.c.b16 %v402, %v399
    %v493 = vpack.c.b16 %v403, %v400
    %v494 = vpack.c.b16 %v404, %v401
    %v495 = vpack.c.b16 %v408, %v405
    %v496 = vpack.c.b16 %v409, %v406
    %v497 = vpack.c.b16 %v410, %v407
    %v498 = vpack.c.b16 %v414, %v411
    %v499 = vpack.c.b16 %v415, %v412
    %v500 = vpack.c.b16 %v416, %v413
    %v501 = vpack.c.b16 %v420, %v417
    %v502 = vpack.c.b16 %v421, %v418
    %v503 = vpack.c.b16 %v422, %v419
    %v504 = vpack.c.b16 %v426, %v423
    %v505 = vpack.c.b16 %v427, %v424
    %v506 = vpack.c.b16 %v428, %v425
    %v507 = vpack.c.b16 %v432, %v429
    %v508 = vpack.c.b16 %v433, %v430
    %v509 = vpack.c.b16 %v434, %v431
    %v510 = vpack.c.b16 %v438, %v435
    %v511 = vpack.c.b16 %v439, %v436
    %v512 = vpack.c.b16 %v440, %v437
    %585 = vmatprep.subr.bf16.mxu0 %v442
    %586 = vmatpush1.bf16.msra.mxu0 %v441
    %587 = vmatprep.subr.bf16.mxu0 %v445
    %588 = vmatpush1.bf16.msra.mxu0 %v444
    %589 = vmatprep.subr.bf16.mxu0 %v448
    %590 = vmatpush1.bf16.msra.mxu0 %v447
    %591 = vmatprep.subr.bf16.mxu0 %v451
    %592 = vmatpush1.bf16.msra.mxu0 %v450
    %593 = vmatprep.subr.bf16.mxu0 %v454
    %594 = vmatpush1.bf16.msra.mxu0 %v453
    %595 = vmatprep.subr.bf16.mxu0 %v457
    %596 = vmatpush1.bf16.msra.mxu0 %v456
    %597 = vmatprep.subr.bf16.mxu0 %v460
    %598 = vmatpush1.bf16.msra.mxu0 %v459
    %599 = vmatprep.subr.bf16.mxu0 %v463
    %600 = vmatpush1.bf16.msra.mxu0 %v462
    %601 = vmatprep.subr.bf16.mxu0 %v466
    %602 = vmatpush1.bf16.msra.mxu0 %v465
    %603 = vmatprep.subr.bf16.mxu0 %v469
    %604 = vmatpush1.bf16.msra.mxu0 %v468
    %605 = vmatprep.subr.bf16.mxu0 %v472
    %606 = vmatpush1.bf16.msra.mxu0 %v471
    %607 = vmatprep.subr.bf16.mxu0 %v475
    %608 = vmatpush1.bf16.msra.mxu0 %v474
    %609 = vmatprep.subr.bf16.mxu0 %v478
    %610 = vmatpush1.bf16.msra.mxu0 %v477
    %611 = vmatprep.subr.bf16.mxu0 %v481
    %612 = vmatpush1.bf16.msra.mxu0 %v480
    %613 = vmatprep.subr.bf16.mxu0 %v484
    %614 = vmatpush1.bf16.msra.mxu0 %v483
    %615 = vmatprep.subr.bf16.mxu0 %v487
    %616 = vmatpush1.bf16.msra.mxu0 %v486
    %617 = vmatprep.mubr.bf16.mxu0 %v196
    %618 = vmatmul.mubr.bf16.gmra.mrb[0].mxu0 %v195
    %v619 = vpop.f32.mrb[0].mxu0
    %v620 = vadd.f32 %v173, %v619
    %v621 = vpop.f32.mrb[0].mxu0
    %v622 = vadd.f32 %v177, %v621
    %v623 = vpop.f32.mrb[0].mxu0
    %v624 = vadd.f32 %v173, %v623
    %v625 = vpop.f32.mrb[0].mxu0
    %v626 = vadd.f32 %v177, %v625
    %627 = vdwg.mxu0
    %628 = vmatprep.subr.bf16.mxu0 %v490
    %629 = vmatpush1.bf16.msra.mxu0 %v489
    %630 = vmatprep.subr.bf16.mxu0 %v493
    %631 = vmatpush1.bf16.msra.mxu0 %v492
    %632 = vmatprep.subr.bf16.mxu0 %v496
    %633 = vmatpush1.bf16.msra.mxu0 %v495
    %634 = vmatprep.subr.bf16.mxu0 %v499
    %635 = vmatpush1.bf16.msra.mxu0 %v498
    %636 = vmatprep.subr.bf16.mxu0 %v502
    %637 = vmatpush1.bf16.msra.mxu0 %v501
    %638 = vmatprep.subr.bf16.mxu0 %v505
    %639 = vmatpush1.bf16.msra.mxu0 %v504
    %640 = vmatprep.subr.bf16.mxu0 %v508
    %641 = vmatpush1.bf16.msra.mxu0 %v507
    %642 = vmatprep.subr.bf16.mxu0 %v511
    %643 = vmatpush1.bf16.msra.mxu0 %v510
    %644 = vmatprep.subr.bf16.mxu0 0
    %645 = vmatpush1.bf16.msra.mxu0 0
    %646 = vmatprep.subr.bf16.mxu0 0
    %647 = vmatpush1.bf16.msra.mxu0 0
    %648 = vmatprep.subr.bf16.mxu0 0
    %649 = vmatpush1.bf16.msra.mxu0 0
    %650 = vmatprep.subr.bf16.mxu0 0
    %651 = vmatpush1.bf16.msra.mxu0 0
    %652 = vmatprep.subr.bf16.mxu0 0
    %653 = vmatpush1.bf16.msra.mxu0 0
    %654 = vmatprep.subr.bf16.mxu0 0
    %655 = vmatpush1.bf16.msra.mxu0 0
    %656 = vmatprep.subr.bf16.mxu0 0
    %657 = vmatpush1.bf16.msra.mxu0 0
    %658 = vmatprep.subr.bf16.mxu0 0
    %659 = vmatpush1.bf16.msra.mxu0 0
    %660 = vmatprep.mubr.bf16.mxu0 0
    %661 = vmatmul.mubr.bf16.gmra.mrb[0].mxu0 %v197
    %v662 = vpop.f32.mrb[0].mxu0
    %v663 = vadd.f32 %v620, %v662
    %v664 = vpop.f32.mrb[0].mxu0
    %v665 = vadd.f32 %v622, %v664
    %v666 = vpop.f32.mrb[0].mxu0
    %v667 = vadd.f32 %v624, %v666
    %v668 = vpop.f32.mrb[0].mxu0
    %v669 = vadd.f32 %v626, %v668
    %670 = vdwg.mxu0
    %671 = vmatprep.subr.bf16.mxu0 0
    %672 = vmatpush1.bf16.msra.mxu0 %v443
    %673 = vmatprep.subr.bf16.mxu0 0
    %674 = vmatpush1.bf16.msra.mxu0 %v446
    %675 = vmatprep.subr.bf16.mxu0 0
    %676 = vmatpush1.bf16.msra.mxu0 %v449
    %677 = vmatprep.subr.bf16.mxu0 0
    %678 = vmatpush1.bf16.msra.mxu0 %v452
    %679 = vmatprep.subr.bf16.mxu0 0
    %680 = vmatpush1.bf16.msra.mxu0 %v455
    %681 = vmatprep.subr.bf16.mxu0 0
    %682 = vmatpush1.bf16.msra.mxu0 %v458
    %683 = vmatprep.subr.bf16.mxu0 0
    %684 = vmatpush1.bf16.msra.mxu0 %v461
    %685 = vmatprep.subr.bf16.mxu0 0
    %686 = vmatpush1.bf16.msra.mxu0 %v464
    %687 = vmatprep.subr.bf16.mxu0 0
    %688 = vmatpush1.bf16.msra.mxu0 %v467
    %689 = vmatprep.subr.bf16.mxu0 0
    %690 = vmatpush1.bf16.msra.mxu0 %v470
    %691 = vmatprep.subr.bf16.mxu0 0
    %692 = vmatpush1.bf16.msra.mxu0 %v473
    %693 = vmatprep.subr.bf16.mxu0 0
    %694 = vmatpush1.bf16.msra.mxu0 %v476
    %695 = vmatprep.subr.bf16.mxu0 0
    %696 = vmatpush1.bf16.msra.mxu0 %v479
    %697 = vmatprep.subr.bf16.mxu0 0
    %698 = vmatpush1.bf16.msra.mxu0 %v482
    %699 = vmatprep.subr.bf16.mxu0 0
    %700 = vmatpush1.bf16.msra.mxu0 %v485
    %701 = vmatprep.subr.bf16.mxu0 0
    %702 = vmatpush1.bf16.msra.mxu0 %v488
    %703 = vmatprep.mubr.bf16.mxu0 %v196
    %704 = vmatmul.mubr.bf16.gmra.mrb[0].mxu0 %v195
    %v705 = vpop.f32.mrb[0].mxu0
    %v706 = vadd.f32 %v181, %v705
    %v707 = vpop.f32.mrb[0].mxu0
    %v708 = vpop.f32.mrb[0].mxu0
    %v709 = vadd.f32 %v181, %v708
    %v710 = vpop.f32.mrb[0].mxu0
    %711 = vdwg.mxu0
    %712 = vmatprep.subr.bf16.mxu0 0
    %713 = vmatpush1.bf16.msra.mxu0 %v491
    %714 = vmatprep.subr.bf16.mxu0 0
    %715 = vmatpush1.bf16.msra.mxu0 %v494
    %716 = vmatprep.subr.bf16.mxu0 0
    %717 = vmatpush1.bf16.msra.mxu0 %v497
    %718 = vmatprep.subr.bf16.mxu0 0
    %719 = vmatpush1.bf16.msra.mxu0 %v500
    %720 = vmatprep.subr.bf16.mxu0 0
    %721 = vmatpush1.bf16.msra.mxu0 %v503
    %722 = vmatprep.subr.bf16.mxu0 0
    %723 = vmatpush1.bf16.msra.mxu0 %v506
    %724 = vmatprep.subr.bf16.mxu0 0
    %725 = vmatpush1.bf16.msra.mxu0 %v509
    %726 = vmatprep.subr.bf16.mxu0 0
    %727 = vmatpush1.bf16.msra.mxu0 %v512
    %728 = vmatprep.subr.bf16.mxu0 0
    %729 = vmatpush1.bf16.msra.mxu0 0
    %730 = vmatprep.subr.bf16.mxu0 0
    %731 = vmatpush1.bf16.msra.mxu0 0
    %732 = vmatprep.subr.bf16.mxu0 0
    %733 = vmatpush1.bf16.msra.mxu0 0
    %734 = vmatprep.subr.bf16.mxu0 0
    %735 = vmatpush1.bf16.msra.mxu0 0
    %736 = vmatprep.subr.bf16.mxu0 0
    %737 = vmatpush1.bf16.msra.mxu0 0
    %738 = vmatprep.subr.bf16.mxu0 0
    %739 = vmatpush1.bf16.msra.mxu0 0
    %740 = vmatprep.subr.bf16.mxu0 0
    %741 = vmatpush1.bf16.msra.mxu0 0
    %742 = vmatprep.subr.bf16.mxu0 0
    %743 = vmatpush1.bf16.msra.mxu0 0
    %744 = vmatprep.mubr.bf16.mxu0 0
    %745 = vmatmul.mubr.bf16.gmra.mrb[0].mxu0 %v197
    %v746 = vpop.f32.mrb[0].mxu0
    %v747 = vadd.f32 %v706, %v746
    %v748 = vpop.f32.mrb[0].mxu0
    %v749 = vpop.f32.mrb[0].mxu0
    %v750 = vadd.f32 %v709, %v749
    %v751 = vpop.f32.mrb[0].mxu0
    %752 = vdwg.mxu0
    %v753 = vmax.f32 %v663, 0.0
    %v754 = vmax.f32 %v665, 0.0
    %v755 = vmax.f32 %v747, 0.0
    %v756 = vmax.f32 %v667, 0.0
    %v757 = vmax.f32 %v669, 0.0
    %v758 = vmax.f32 %v750, 0.0
    %v759 = vpack.c.bf16 %v756, %v753
    %v760 = vpack.c.bf16 %v757, %v754
    %v761 = vpack.c.bf16 %v758, %v755
    %v762 = vld [vmem:[#allocation4] sm:$0xff]
    %v763 = vld [vmem:[#allocation4 + $0x8] sm:$0xff]
    %v764 = vld [vmem:[#allocation4 + $0x10] sm:$0xff]
    %v765 = vld [vmem:[#allocation4 + $0x18] sm:$0xff]
    %v766 = vld [vmem:[#allocation4 + $0x20] sm:$0xff]
    %v767 = vld [vmem:[#allocation4 + $0x28] sm:$0xff]
    %v768 = vld [vmem:[#allocation4 + $0x30] sm:$0xff]
    %v769 = vld [vmem:[#allocation4 + $0x38] sm:$0xff]
    %v770 = vld [vmem:[#allocation4 + $0x40] sm:$0xff]
    %v771 = vld [vmem:[#allocation4 + $0x48] sm:$0xff]
    %v772 = vld [vmem:[#allocation4 + $0x50] sm:$0xff]
    %v773 = vld [vmem:[#allocation4 + $0x58] sm:$0xff]
    %v774 = vld [vmem:[#allocation4 + $0x60] sm:$0xff]
    %v775 = vld [vmem:[#allocation4 + $0x68] sm:$0xff]
    %v776 = vld [vmem:[#allocation4 + $0x70] sm:$0xff]
    %v777 = vld [vmem:[#allocation4 + $0x78] sm:$0xff]
    %v778 = vld [vmem:[#allocation4 + $0x80] sm:$0xff]
    %v779 = vld [vmem:[#allocation4 + $0x88] sm:$0xff]
    %v780 = vld [vmem:[#allocation4 + $0x90] sm:$0xff]
    %v781 = vld [vmem:[#allocation4 + $0x98] sm:$0xff]
    %v782 = vld [vmem:[#allocation4 + $0xa0] sm:$0xff]
    %v783 = vld [vmem:[#allocation4 + $0xa8] sm:$0xff]
    %v784 = vld [vmem:[#allocation4 + $0xb0] sm:$0xff]
    %v785 = vld [vmem:[#allocation4 + $0xb8] sm:$0xff]
    %v786 = vld [vmem:[#allocation4 + $0xc0] sm:$0xff]
    %v787 = vld [vmem:[#allocation4 + $0xc8] sm:$0xff]
    %v788 = vld [vmem:[#allocation4 + $0xd0] sm:$0xff]
    %v789 = vld [vmem:[#allocation4 + $0xd8] sm:$0xff]
    %v790 = vld [vmem:[#allocation4 + $0xe0] sm:$0xff]
    %v791 = vld [vmem:[#allocation4 + $0xe8] sm:$0xff]
    %v792 = vld [vmem:[#allocation4 + $0xf0] sm:$0xff]
    %v793 = vld [vmem:[#allocation4 + $0xf8] sm:$0xff]
    %v794 = vld [vmem:[#allocation4 + $0x100] sm:$0xff]
    %v795 = vld [vmem:[#allocation4 + $0x108] sm:$0xff]
    %v796 = vld [vmem:[#allocation4 + $0x110] sm:$0xff]
    %v797 = vld [vmem:[#allocation4 + $0x118] sm:$0xff]
    %v798 = vld [vmem:[#allocation4 + $0x120] sm:$0xff]
    %v799 = vld [vmem:[#allocation4 + $0x128] sm:$0xff]
    %v800 = vld [vmem:[#allocation4 + $0x130] sm:$0xff]
    %v801 = vld [vmem:[#allocation4 + $0x138] sm:$0xff]
    %v802 = vld [vmem:[#allocation4 + $0x140] sm:$0xff]
    %v803 = vld [vmem:[#allocation4 + $0x148] sm:$0xff]
    %v804 = vld [vmem:[#allocation4 + $0x150] sm:$0xff]
    %v805 = vld [vmem:[#allocation4 + $0x158] sm:$0xff]
    %v806 = vld [vmem:[#allocation4 + $0x160] sm:$0xff]
    %v807 = vld [vmem:[#allocation4 + $0x168] sm:$0xff]
    %v808 = vld [vmem:[#allocation4 + $0x170] sm:$0xff]
    %v809 = vld [vmem:[#allocation4 + $0x178] sm:$0xff]
    %v810 = vld [vmem:[%s4] sm:$0x3]
    %v812 = vlaneseq
    %v813 = vshrl.u32 %v812, 7
    %v814 = vsub.s32 0, %v813
    %v815 = vrot.slane %v810, %v814
    %v816 = vlaneseq
    %v817 = vshrl.u32 %v816, 7
    %v818 = vsub.s32 1, %v817
    %v819 = vrot.slane %v810, %v818
    %v870 = vunpack.c.l.b16 %v762
    %v871 = vunpack.c.h.b16 %v762
    %v872 = vunpack.c.l.b16 %v763
    %v873 = vunpack.c.h.b16 %v763
    %v874 = vunpack.c.l.b16 %v764
    %v875 = vunpack.c.h.b16 %v764
    %v876 = vunpack.c.l.b16 %v765
    %v877 = vunpack.c.h.b16 %v765
    %v878 = vunpack.c.l.b16 %v766
    %v879 = vunpack.c.h.b16 %v766
    %v880 = vunpack.c.l.b16 %v767
    %v881 = vunpack.c.h.b16 %v767
    %v882 = vunpack.c.l.b16 %v768
    %v883 = vunpack.c.h.b16 %v768
    %v884 = vunpack.c.l.b16 %v769
    %v885 = vunpack.c.h.b16 %v769
    %v886 = vunpack.c.l.b16 %v770
    %v887 = vunpack.c.h.b16 %v770
    %v888 = vunpack.c.l.b16 %v771
    %v889 = vunpack.c.h.b16 %v771
    %v890 = vunpack.c.l.b16 %v772
    %v891 = vunpack.c.h.b16 %v772
    %v892 = vunpack.c.l.b16 %v773
    %v893 = vunpack.c.h.b16 %v773
    %v894 = vunpack.c.l.b16 %v774
    %v895 = vunpack.c.h.b16 %v774
    %v896 = vunpack.c.l.b16 %v775
    %v897 = vunpack.c.h.b16 %v775
    %v898 = vunpack.c.l.b16 %v776
    %v899 = vunpack.c.h.b16 %v776
    %v900 = vunpack.c.l.b16 %v777
    %v901 = vunpack.c.h.b16 %v777
    %v902 = vunpack.c.l.b16 %v778
    %v903 = vunpack.c.h.b16 %v778
    %v904 = vunpack.c.l.b16 %v779
    %v905 = vunpack.c.h.b16 %v779
    %v906 = vunpack.c.l.b16 %v780
    %v907 = vunpack.c.h.b16 %v780
    %v908 = vunpack.c.l.b16 %v781
    %v909 = vunpack.c.h.b16 %v781
    %v910 = vunpack.c.l.b16 %v782
    %v911 = vunpack.c.h.b16 %v782
    %v912 = vunpack.c.l.b16 %v783
    %v913 = vunpack.c.h.b16 %v783
    %v914 = vunpack.c.l.b16 %v784
    %v915 = vunpack.c.h.b16 %v784
    %v916 = vunpack.c.l.b16 %v785
    %v917 = vunpack.c.h.b16 %v785
    %v918 = vunpack.c.l.b16 %v786
    %v919 = vunpack.c.h.b16 %v786
    %v920 = vunpack.c.l.b16 %v787
    %v921 = vunpack.c.h.b16 %v787
    %v922 = vunpack.c.l.b16 %v788
    %v923 = vunpack.c.h.b16 %v788
    %v924 = vunpack.c.l.b16 %v789
    %v925 = vunpack.c.h.b16 %v789
    %v926 = vunpack.c.l.b16 %v790
    %v927 = vunpack.c.h.b16 %v790
    %v928 = vunpack.c.l.b16 %v791
    %v929 = vunpack.c.h.b16 %v791
    %v930 = vunpack.c.l.b16 %v792
    %v931 = vunpack.c.h.b16 %v792
    %v932 = vunpack.c.l.b16 %v793
    %v933 = vunpack.c.h.b16 %v793
    %v934 = vunpack.c.l.b16 %v794
    %v935 = vunpack.c.h.b16 %v794
    %v936 = vunpack.c.l.b16 %v795
    %v937 = vunpack.c.h.b16 %v795
    %v938 = vunpack.c.l.b16 %v796
    %v939 = vunpack.c.h.b16 %v796
    %v940 = vunpack.c.l.b16 %v797
    %v941 = vunpack.c.h.b16 %v797
    %v942 = vunpack.c.l.b16 %v798
    %v943 = vunpack.c.h.b16 %v798
    %v944 = vunpack.c.l.b16 %v799
    %v945 = vunpack.c.h.b16 %v799
    %v946 = vunpack.c.l.b16 %v800
    %v947 = vunpack.c.h.b16 %v800
    %v948 = vunpack.c.l.b16 %v801
    %v949 = vunpack.c.h.b16 %v801
    %v950 = vunpack.c.l.b16 %v802
    %v951 = vunpack.c.h.b16 %v802
    %v952 = vunpack.c.l.b16 %v803
    %v953 = vunpack.c.h.b16 %v803
    %v954 = vunpack.c.l.b16 %v804
    %v955 = vunpack.c.h.b16 %v804
    %v956 = vunpack.c.l.b16 %v805
    %v957 = vunpack.c.h.b16 %v805
    %v958 = vunpack.c.l.b16 %v806
    %v959 = vunpack.c.h.b16 %v806
    %v960 = vunpack.c.l.b16 %v807
    %v961 = vunpack.c.h.b16 %v807
    %v962 = vunpack.c.l.b16 %v808
    %v963 = vunpack.c.h.b16 %v808
    %v964 = vunpack.c.l.b16 %v809
    %v965 = vunpack.c.h.b16 %v809
    %v966 = vpack.c.b16 %v872, %v870
    %v967 = vpack.c.b16 %v873, %v871
    %v968 = vpack.c.b16 %v876, %v874
    %v969 = vpack.c.b16 %v877, %v875
    %v970 = vpack.c.b16 %v880, %v878
    %v971 = vpack.c.b16 %v881, %v879
    %v972 = vpack.c.b16 %v884, %v882
    %v973 = vpack.c.b16 %v885, %v883
    %v974 = vpack.c.b16 %v888, %v886
    %v975 = vpack.c.b16 %v889, %v887
    %v976 = vpack.c.b16 %v892, %v890
    %v977 = vpack.c.b16 %v893, %v891
    %v978 = vpack.c.b16 %v896, %v894
    %v979 = vpack.c.b16 %v897, %v895
    %v980 = vpack.c.b16 %v900, %v898
    %v981 = vpack.c.b16 %v901, %v899
    %v982 = vpack.c.b16 %v904, %v902
    %v983 = vpack.c.b16 %v905, %v903
    %v984 = vpack.c.b16 %v908, %v906
    %v985 = vpack.c.b16 %v909, %v907
    %v986 = vpack.c.b16 %v912, %v910
    %v987 = vpack.c.b16 %v913, %v911
    %v988 = vpack.c.b16 %v916, %v914
    %v989 = vpack.c.b16 %v917, %v915
    %v990 = vpack.c.b16 %v920, %v918
    %v991 = vpack.c.b16 %v921, %v919
    %v992 = vpack.c.b16 %v924, %v922
    %v993 = vpack.c.b16 %v925, %v923
    %v994 = vpack.c.b16 %v928, %v926
    %v995 = vpack.c.b16 %v929, %v927
    %v996 = vpack.c.b16 %v932, %v930
    %v997 = vpack.c.b16 %v933, %v931
    %v998 = vpack.c.b16 %v936, %v934
    %v999 = vpack.c.b16 %v937, %v935
    %v1000 = vpack.c.b16 %v940, %v938
    %v1001 = vpack.c.b16 %v941, %v939
    %v1002 = vpack.c.b16 %v944, %v942
    %v1003 = vpack.c.b16 %v945, %v943
    %v1004 = vpack.c.b16 %v948, %v946
    %v1005 = vpack.c.b16 %v949, %v947
    %v1006 = vpack.c.b16 %v952, %v950
    %v1007 = vpack.c.b16 %v953, %v951
    %v1008 = vpack.c.b16 %v956, %v954
    %v1009 = vpack.c.b16 %v957, %v955
    %v1010 = vpack.c.b16 %v960, %v958
    %v1011 = vpack.c.b16 %v961, %v959
    %v1012 = vpack.c.b16 %v964, %v962
    %v1013 = vpack.c.b16 %v965, %v963
    %1062 = vmatprep.subr.bf16.mxu0 %v967
    %1063 = vmatpush1.bf16.msra.mxu0 %v966
    %1064 = vmatprep.subr.bf16.mxu0 %v969
    %1065 = vmatpush1.bf16.msra.mxu0 %v968
    %1066 = vmatprep.subr.bf16.mxu0 %v971
    %1067 = vmatpush1.bf16.msra.mxu0 %v970
    %1068 = vmatprep.subr.bf16.mxu0 %v973
    %1069 = vmatpush1.bf16.msra.mxu0 %v972
    %1070 = vmatprep.subr.bf16.mxu0 %v975
    %1071 = vmatpush1.bf16.msra.mxu0 %v974
    %1072 = vmatprep.subr.bf16.mxu0 %v977
    %1073 = vmatpush1.bf16.msra.mxu0 %v976
    %1074 = vmatprep.subr.bf16.mxu0 %v979
    %1075 = vmatpush1.bf16.msra.mxu0 %v978
    %1076 = vmatprep.subr.bf16.mxu0 %v981
    %1077 = vmatpush1.bf16.msra.mxu0 %v980
    %1078 = vmatprep.subr.bf16.mxu0 %v983
    %1079 = vmatpush1.bf16.msra.mxu0 %v982
    %1080 = vmatprep.subr.bf16.mxu0 %v985
    %1081 = vmatpush1.bf16.msra.mxu0 %v984
    %1082 = vmatprep.subr.bf16.mxu0 %v987
    %1083 = vmatpush1.bf16.msra.mxu0 %v986
    %1084 = vmatprep.subr.bf16.mxu0 %v989
    %1085 = vmatpush1.bf16.msra.mxu0 %v988
    %1086 = vmatprep.subr.bf16.mxu0 %v991
    %1087 = vmatpush1.bf16.msra.mxu0 %v990
    %1088 = vmatprep.subr.bf16.mxu0 %v993
    %1089 = vmatpush1.bf16.msra.mxu0 %v992
    %1090 = vmatprep.subr.bf16.mxu0 %v995
    %1091 = vmatpush1.bf16.msra.mxu0 %v994
    %1092 = vmatprep.subr.bf16.mxu0 %v997
    %1093 = vmatpush1.bf16.msra.mxu0 %v996
    %1094 = vmatprep.mubr.bf16.mxu0 %v760
    %1095 = vmatmul.mubr.bf16.gmra.mrb[0].mxu0 %v759
    %v1096 = vpop.f32.mrb[0].mxu0
    %v1097 = vadd.f32 %v815, %v1096
    %v1098 = vpop.f32.mrb[0].mxu0
    %v1099 = vadd.f32 %v819, %v1098
    %v1100 = vpop.f32.mrb[0].mxu0
    %v1101 = vadd.f32 %v815, %v1100
    %v1102 = vpop.f32.mrb[0].mxu0
    %v1103 = vadd.f32 %v819, %v1102
    %1104 = vdwg.mxu0
    %1105 = vmatprep.subr.bf16.mxu0 %v999
    %1106 = vmatpush1.bf16.msra.mxu0 %v998
    %1107 = vmatprep.subr.bf16.mxu0 %v1001
    %1108 = vmatpush1.bf16.msra.mxu0 %v1000
    %1109 = vmatprep.subr.bf16.mxu0 %v1003
    %1110 = vmatpush1.bf16.msra.mxu0 %v1002
    %1111 = vmatprep.subr.bf16.mxu0 %v1005
    %1112 = vmatpush1.bf16.msra.mxu0 %v1004
    %1113 = vmatprep.subr.bf16.mxu0 %v1007
    %1114 = vmatpush1.bf16.msra.mxu0 %v1006
    %1115 = vmatprep.subr.bf16.mxu0 %v1009
    %1116 = vmatpush1.bf16.msra.mxu0 %v1008
    %1117 = vmatprep.subr.bf16.mxu0 %v1011
    %1118 = vmatpush1.bf16.msra.mxu0 %v1010
    %1119 = vmatprep.subr.bf16.mxu0 %v1013
    %1120 = vmatpush1.bf16.msra.mxu0 %v1012
    %1121 = vmatprep.subr.bf16.mxu0 0
    %1122 = vmatpush1.bf16.msra.mxu0 0
    %1123 = vmatprep.subr.bf16.mxu0 0
    %1124 = vmatpush1.bf16.msra.mxu0 0
    %1125 = vmatprep.subr.bf16.mxu0 0
    %1126 = vmatpush1.bf16.msra.mxu0 0
    %1127 = vmatprep.subr.bf16.mxu0 0
    %1128 = vmatpush1.bf16.msra.mxu0 0
    %1129 = vmatprep.subr.bf16.mxu0 0
    %1130 = vmatpush1.bf16.msra.mxu0 0
    %1131 = vmatprep.subr.bf16.mxu0 0
    %1132 = vmatpush1.bf16.msra.mxu0 0
    %1133 = vmatprep.subr.bf16.mxu0 0
    %1134 = vmatpush1.bf16.msra.mxu0 0
    %1135 = vmatprep.subr.bf16.mxu0 0
    %1136 = vmatpush1.bf16.msra.mxu0 0
    %1137 = vmatprep.mubr.bf16.mxu0 0
    %1138 = vmatmul.mubr.bf16.gmra.mrb[0].mxu0 %v761
    %v1139 = vpop.f32.mrb[0].mxu0
    %v1140 = vadd.f32 %v1097, %v1139
    %v1141 = vpop.f32.mrb[0].mxu0
    %v1142 = vadd.f32 %v1099, %v1141
    %v1143 = vpop.f32.mrb[0].mxu0
    %v1144 = vadd.f32 %v1101, %v1143
    %v1145 = vpop.f32.mrb[0].mxu0
    %v1146 = vadd.f32 %v1103, %v1145
    %1147 = vdwg.mxu0
    %v1148 = vmax.f32 %v1140, 0.0
    %v1149 = vmax.f32 %v1142, 0.0
    %v1150 = vmax.f32 %v1144, 0.0
    %v1151 = vmax.f32 %v1146, 0.0
    %v1152 = vpack.c.bf16 %v1150, %v1148
    %v1153 = vpack.c.bf16 %v1151, %v1149
    %v1154 = vld [vmem:[#allocation6] sm:$0xf]
    %v1155 = vld [vmem:[#allocation6 + $0x4] sm:$0xf]
    %v1156 = vld [vmem:[#allocation6 + $0x8] sm:$0xf]
    %v1157 = vld [vmem:[#allocation6 + $0xc] sm:$0xf]
    %v1158 = vld [vmem:[#allocation6 + $0x10] sm:$0xf]
    %v1159 = vld [vmem:[#allocation6 + $0x14] sm:$0xf]
    %v1160 = vld [vmem:[#allocation6 + $0x18] sm:$0xf]
    %v1161 = vld [vmem:[#allocation6 + $0x1c] sm:$0xf]
    %v1162 = vld [vmem:[#allocation6 + $0x20] sm:$0xf]
    %v1163 = vld [vmem:[#allocation6 + $0x24] sm:$0xf]
    %v1164 = vld [vmem:[#allocation6 + $0x28] sm:$0xf]
    %v1165 = vld [vmem:[#allocation6 + $0x2c] sm:$0xf]
    %v1166 = vld [vmem:[#allocation6 + $0x30] sm:$0xf]
    %v1167 = vld [vmem:[#allocation6 + $0x34] sm:$0xf]
    %v1168 = vld [vmem:[#allocation6 + $0x38] sm:$0xf]
    %v1169 = vld [vmem:[#allocation6 + $0x3c] sm:$0xf]
    %v1170 = vld [vmem:[#allocation6 + $0x40] sm:$0xf]
    %v1171 = vld [vmem:[#allocation6 + $0x44] sm:$0xf]
    %v1172 = vld [vmem:[#allocation6 + $0x48] sm:$0xf]
    %v1173 = vld [vmem:[#allocation6 + $0x4c] sm:$0xf]
    %v1174 = vld [vmem:[#allocation6 + $0x50] sm:$0xf]
    %v1175 = vld [vmem:[#allocation6 + $0x54] sm:$0xf]
    %v1176 = vld [vmem:[#allocation6 + $0x58] sm:$0xf]
    %v1177 = vld [vmem:[#allocation6 + $0x5c] sm:$0xf]
    %v1178 = vld [vmem:[#allocation6 + $0x60] sm:$0xf]
    %v1179 = vld [vmem:[#allocation6 + $0x64] sm:$0xf]
    %v1180 = vld [vmem:[#allocation6 + $0x68] sm:$0xf]
    %v1181 = vld [vmem:[#allocation6 + $0x6c] sm:$0xf]
    %v1182 = vld [vmem:[#allocation6 + $0x70] sm:$0xf]
    %v1183 = vld [vmem:[#allocation6 + $0x74] sm:$0xf]
    %v1184 = vld [vmem:[#allocation6 + $0x78] sm:$0xf]
    %v1185 = vld [vmem:[#allocation6 + $0x7c] sm:$0xf]
    %v1186 = vld [vmem:[%s6] sm:$0x1]
    %v1188 = vlaneseq
    %v1189 = vshrl.u32 %v1188, 7
    %v1190 = vsub.s32 0, %v1189
    %v1191 = vrot.slane %v1186, %v1190
    %v1225 = vunpack.c.l.b16 %v1154
    %v1226 = vunpack.c.l.b16 %v1155
    %v1227 = vunpack.c.l.b16 %v1156
    %v1228 = vunpack.c.l.b16 %v1157
    %v1229 = vunpack.c.l.b16 %v1158
    %v1230 = vunpack.c.l.b16 %v1159
    %v1231 = vunpack.c.l.b16 %v1160
    %v1232 = vunpack.c.l.b16 %v1161
    %v1233 = vunpack.c.l.b16 %v1162
    %v1234 = vunpack.c.l.b16 %v1163
    %v1235 = vunpack.c.l.b16 %v1164
    %v1236 = vunpack.c.l.b16 %v1165
    %v1237 = vunpack.c.l.b16 %v1166
    %v1238 = vunpack.c.l.b16 %v1167
    %v1239 = vunpack.c.l.b16 %v1168
    %v1240 = vunpack.c.l.b16 %v1169
    %v1241 = vunpack.c.l.b16 %v1170
    %v1242 = vunpack.c.l.b16 %v1171
    %v1243 = vunpack.c.l.b16 %v1172
    %v1244 = vunpack.c.l.b16 %v1173
    %v1245 = vunpack.c.l.b16 %v1174
    %v1246 = vunpack.c.l.b16 %v1175
    %v1247 = vunpack.c.l.b16 %v1176
    %v1248 = vunpack.c.l.b16 %v1177
    %v1249 = vunpack.c.l.b16 %v1178
    %v1250 = vunpack.c.l.b16 %v1179
    %v1251 = vunpack.c.l.b16 %v1180
    %v1252 = vunpack.c.l.b16 %v1181
    %v1253 = vunpack.c.l.b16 %v1182
    %v1254 = vunpack.c.l.b16 %v1183
    %v1255 = vunpack.c.l.b16 %v1184
    %v1256 = vunpack.c.l.b16 %v1185
    %v1257 = vpack.c.b16 %v1226, %v1225
    %v1258 = vpack.c.b16 %v1228, %v1227
    %v1259 = vpack.c.b16 %v1230, %v1229
    %v1260 = vpack.c.b16 %v1232, %v1231
    %v1261 = vpack.c.b16 %v1234, %v1233
    %v1262 = vpack.c.b16 %v1236, %v1235
    %v1263 = vpack.c.b16 %v1238, %v1237
    %v1264 = vpack.c.b16 %v1240, %v1239
    %v1265 = vpack.c.b16 %v1242, %v1241
    %v1266 = vpack.c.b16 %v1244, %v1243
    %v1267 = vpack.c.b16 %v1246, %v1245
    %v1268 = vpack.c.b16 %v1248, %v1247
    %v1269 = vpack.c.b16 %v1250, %v1249
    %v1270 = vpack.c.b16 %v1252, %v1251
    %v1271 = vpack.c.b16 %v1254, %v1253
    %v1272 = vpack.c.b16 %v1256, %v1255
    %1289 = vmatprep.subr.bf16.mxu0 0
    %1290 = vmatpush1.bf16.msra.mxu0 %v1257
    %1291 = vmatprep.subr.bf16.mxu0 0
    %1292 = vmatpush1.bf16.msra.mxu0 %v1258
    %1293 = vmatprep.subr.bf16.mxu0 0
    %1294 = vmatpush1.bf16.msra.mxu0 %v1259
    %1295 = vmatprep.subr.bf16.mxu0 0
    %1296 = vmatpush1.bf16.msra.mxu0 %v1260
    %1297 = vmatprep.subr.bf16.mxu0 0
    %1298 = vmatpush1.bf16.msra.mxu0 %v1261
    %1299 = vmatprep.subr.bf16.mxu0 0
    %1300 = vmatpush1.bf16.msra.mxu0 %v1262
    %1301 = vmatprep.subr.bf16.mxu0 0
    %1302 = vmatpush1.bf16.msra.mxu0 %v1263
    %1303 = vmatprep.subr.bf16.mxu0 0
    %1304 = vmatpush1.bf16.msra.mxu0 %v1264
    %1305 = vmatprep.subr.bf16.mxu0 0
    %1306 = vmatpush1.bf16.msra.mxu0 %v1265
    %1307 = vmatprep.subr.bf16.mxu0 0
    %1308 = vmatpush1.bf16.msra.mxu0 %v1266
    %1309 = vmatprep.subr.bf16.mxu0 0
    %1310 = vmatpush1.bf16.msra.mxu0 %v1267
    %1311 = vmatprep.subr.bf16.mxu0 0
    %1312 = vmatpush1.bf16.msra.mxu0 %v1268
    %1313 = vmatprep.subr.bf16.mxu0 0
    %1314 = vmatpush1.bf16.msra.mxu0 %v1269
    %1315 = vmatprep.subr.bf16.mxu0 0
    %1316 = vmatpush1.bf16.msra.mxu0 %v1270
    %1317 = vmatprep.subr.bf16.mxu0 0
    %1318 = vmatpush1.bf16.msra.mxu0 %v1271
    %1319 = vmatprep.subr.bf16.mxu0 0
    %1320 = vmatpush1.bf16.msra.mxu0 %v1272
    %1321 = vmatprep.mubr.bf16.mxu0 %v1153
    %1322 = vmatmul.mubr.bf16.gmra.mrb[0].mxu0 %v1152
    %v1323 = vpop.f32.mrb[0].mxu0
    %v1324 = vadd.f32 %v1191, %v1323
    %v1325 = vpop.f32.mrb[0].mxu0
    %v1326 = vpop.f32.mrb[0].mxu0
    %v1327 = vadd.f32 %v1191, %v1326
    %v1328 = vpop.f32.mrb[0].mxu0
    %1329 = vdwg.mxu0
    %1330 = vst [vmem:[%s7] sm:$0xff] %v1324
    %1331 = vst [vmem:[%s7 + $0x8] sm:$0xff] %v1327
    // Predicated region
    $region42: #{manual_forward.1} parent=1 // pred_check
      _
    $region43: #{manual_forward.1} parent=1 // pred_check_branch
      %1333 = sbr.rel (0) target = $region45
    $region44: #{manual_forward.1} parent=1 // pred_region
      _
    $region45: #{manual_forward.1} parent=1 // pred_fallthru
      _
    // Predicated region
    $region46: #{manual_forward.1} parent=1 // pred_check
      _
    $region47: #{manual_forward.1} parent=1 // pred_check_branch
      %1335 = sbr.rel (0) target = $region49
    $region48: #{manual_forward.1} parent=1 // pred_region
      _
    $region49: #{manual_forward.1} parent=1 // pred_fallthru
      _
    %1336 = vsyncpa [#allocation3], 1
    %1337 = vsyncpa [#allocation5], 1

</llo_original>
